<compile_context>
chip_gen: v7x
topology: tpu7x:2x2x1
jax: 0.10.0
libtpu: 0.0.40
codegen_flags: <defaults>
</compile_context>

<pallas_src>
import jax
import jax.numpy as jnp
from jax.experimental import pallas as pl
from jax.experimental.pallas import tpu as pltpu


# -----------------------------------------------------------------------------
# Primary path: zero-copy identity (no tile DMA at all).
# -----------------------------------------------------------------------------
def _identity_noop_kernel(x_ref, o_ref):
    # Output buffer aliases the input buffer (input_output_aliases={0: 0});
    # there is nothing to compute or move.  touch() just gives the kernel a
    # read/write dependency on the aliased output so it cannot be reordered or
    # dead-code-eliminated.
    del x_ref
    pltpu.touch(o_ref)


def _zero_copy_forward(x):
    return pl.pallas_call(
        _identity_noop_kernel,
        out_shape=jax.ShapeDtypeStruct(x.shape, x.dtype),
        in_specs=[pl.BlockSpec(memory_space=pl.ANY)],
        out_specs=pl.BlockSpec(memory_space=pl.ANY),
        input_output_aliases={0: 0},
        cost_estimate=pl.CostEstimate(
            flops=0, transcendentals=0, bytes_accessed=0
        ),
    )(x)


# -----------------------------------------------------------------------------
# Fallback path: near-roofline tiled copy (only used if the zero-copy path
# fails to lower on the local toolchain).
# -----------------------------------------------------------------------------
def _identity_copy_kernel(x_ref, o_ref):
    o_ref[...] = x_ref[...]


def _sublane_multiple(dtype):
    # Sub-32-bit dtypes pack along sublanes: f32 -> 8 rows, bf16 -> 16,
    # int8/fp8 -> 32.
    return max(8, 32 // jnp.dtype(dtype).itemsize)


def _choose_lane_dim(total):
    # Largest lane-dense (multiple of 128) last dim that divides the tensor.
    for c in (1024, 512, 256, 128):
        if total % c == 0:
            return c
    return None


def _choose_tile_rows(rows, row_bytes, sub):
    # Largest tile that: is a multiple of the dtype's sublane packing, divides
    # `rows` exactly (uniform tiles -> unmasked full-width stores), stays under
    # ~2 MiB per buffer (double-buffered in+out fits v5e's 16 MiB default
    # scoped VMEM), and leaves >= 2 grid steps when possible so both v7x
    # TensorCores participate.
    max_tile_bytes = 2 * 1024 * 1024
    cap = min(rows, max(sub, max_tile_bytes // max(row_bytes, 1)))
    if rows >= 2 * sub:
        cap = min(cap, rows // 2)
    cap = max(sub, (cap // sub) * sub)
    for t in range(cap, 0, -sub):
        if rows % t == 0:
            return t
    return rows  # no aligned divisor: single full-array block (always legal)


def _tiled_copy_forward(x):
    orig_shape = x.shape
    dtype = x.dtype
    total = x.size
    itemsize = jnp.dtype(dtype).itemsize
    cost = pl.CostEstimate(
        flops=0, transcendentals=0, bytes_accessed=2 * total * itemsize
    )

    c_lane = _choose_lane_dim(total)
    if c_lane is None:
        # Element count not a multiple of 128: one full-array block.
        flat = x.reshape(1, total)
        out = pl.pallas_call(
            _identity_copy_kernel,
            out_shape=jax.ShapeDtypeStruct(flat.shape, dtype),
            grid_spec=pl.GridSpec(
                grid=(1,),
                in_specs=[pl.BlockSpec(flat.shape, lambda i: (0, 0))],
                out_specs=pl.BlockSpec(flat.shape, lambda i: (0, 0)),
            ),
            input_output_aliases={0: 0},
            cost_estimate=cost,
        )(flat)
        return out.reshape(orig_shape)

    rows = total // c_lane
    flat = x.reshape(rows, c_lane)
    tile_r = _choose_tile_rows(rows, c_lane * itemsize, _sublane_multiple(dtype))

    out = pl.pallas_call(
        _identity_copy_kernel,
        out_shape=jax.ShapeDtypeStruct((rows, c_lane), dtype),
        grid_spec=pl.GridSpec(
            grid=(rows // tile_r,),
            in_specs=[pl.BlockSpec((tile_r, c_lane), lambda i: (i, 0))],
            out_specs=pl.BlockSpec((tile_r, c_lane), lambda i: (i, 0)),
        ),
        input_output_aliases={0: 0},
        cost_estimate=cost,
        compiler_params=pltpu.CompilerParams(
            dimension_semantics=("parallel",)
        ),
    )(flat)
    return out.reshape(orig_shape)


# -----------------------------------------------------------------------------
# Public forward: zero-copy if it lowers here, otherwise the tiled copy.
# Input is donated so input_output_aliases={0: 0} is realizable at the XLA
# boundary (true in-place identity, no defensive copy).
# -----------------------------------------------------------------------------
def _build_forward():
    zero_copy = jax.jit(_zero_copy_forward, donate_argnums=0)
    try:
        probe = jnp.zeros((8, 128), jnp.float32)
        jax.block_until_ready(zero_copy(probe))
        return zero_copy
    except Exception:
        return jax.jit(_tiled_copy_forward, donate_argnums=0)


empty_module_forward = _build_forward()


if __name__ == "__main__":
    key = jax.random.PRNGKey(0)
    # NCHW input, matching PyTorch conv-style layout.
    x = jax.random.normal(key, (2, 4, 16, 16), dtype=jnp.float32)
    expected = x.copy()  # keep a reference copy: x itself is donated below.

    y = empty_module_forward(x)
    y = jax.block_until_ready(y)

    assert y.shape == expected.shape and y.dtype == expected.dtype
    assert bool(jnp.all(y == expected))
    print("KERNEL_OK")
</pallas_src>

<mosaic_0001>
module attributes {stable_mosaic.version = 11 : i64} {
  func.func @_identity_noop_kernel(%arg0: memref<8x128xf32, #tpu.memory_space<any>>, %arg1: memref<8x128xf32, #tpu.memory_space<any>>) attributes {dimension_semantics = [], scalar_prefetch = 0 : i64, scratch_operands = 0 : i64, tpu.core_type = #tpu.core_type<tc>} {
    return
  }
}

module attributes {stable_mosaic.version = 11 : i64} {
  func.func @_identity_copy_kernel(%arg0: i32, %arg1: memref<2x1024xf32, #tpu.memory_space<vmem>>, %arg2: memref<2x1024xf32, #tpu.memory_space<vmem>>) attributes {dimension_semantics = [#tpu.dimension_semantics<parallel>], iteration_bounds = array<i64: 1>, scalar_prefetch = 0 : i64, scratch_operands = 0 : i64, tpu.core_type = #tpu.core_type<tc>, window_params = [{transform_indices = @transform_0, window_bounds = array<i64: 2, 1024>}, {transform_indices = @transform_1, window_bounds = array<i64: 2, 1024>}]} {
    %c0 = arith.constant 0 : index
    %c0_0 = arith.constant 0 : index
    %0 = vector.load %arg1[%c0, %c0_0] : memref<2x1024xf32, #tpu.memory_space<vmem>>, vector<2x1024xf32>
    %c0_1 = arith.constant 0 : index
    %c0_2 = arith.constant 0 : index
    %1 = vector.load %arg2[%c0_1, %c0_2] : memref<2x1024xf32, #tpu.memory_space<vmem>>, vector<2x1024xf32>
    tpu.vector_store %arg2[%c0_1, %c0_2], %0 {strides = array<i32>} : memref<2x1024xf32, #tpu.memory_space<vmem>>, vector<2x1024xf32>,
    return
  }
  func.func @transform_0(%arg0: i32) -> (i32, i32) {
    %c0_i32 = arith.constant 0 : i32
    %c0_i32_0 = arith.constant 0 : i32
    return %arg0, %c0_i32 : i32, i32
  }
  func.func @transform_1(%arg0: i32) -> (i32, i32) {
    %c0_i32 = arith.constant 0 : i32
    %c0_i32_0 = arith.constant 0 : i32
    return %arg0, %c0_i32 : i32, i32
  }
}

</mosaic_0001>

<llo_original>
// kernel: _zero_copy_forward.1
$region0: #{_zero_copy_forward.1}
  #allocation0 [shape = 'u32[]', space=smem, size = 0x4, offset = 0x4, fixed_abs, tag = 'smem constant byte address 0x4 - core index']
  #allocation1 [shape = 'u32[144,128]{1,0:T(1,128)}', space=vmem, size = 0x12000, scoped, tag = 'internal scratch']
  %s0 = inlined_call_operand.hbm [shape: f32[8,128], index: 0, kind: input, shape index: {}, may-alias: {0,1}]
  %s1 = inlined_call_operand.hbm [shape: f32[8,128], index: 1, kind: output, shape index: {}, may-alias: {0,1}]
  %s2 = sld [smem:[#allocation0]]
  $region2: #{_zero_copy_forward.1} parent=0
    _
  %s4 = ssub.s32 1, %s2
  %s5 = scalar_select 0, %s4, %s2

// kernel: _tiled_copy_forward.1
$region0: #{_tiled_copy_forward.1}
  #allocation0 [shape = 'u32[]', space=smem, size = 0x4, offset = 0x4, fixed_abs, tag = 'smem constant byte address 0x4 - core index']
  #allocation1 [shape = 'u32[144,128]{1,0:T(1,128)}', space=vmem, size = 0x12000, scoped, tag = 'internal scratch']
  %s0 = inlined_call_operand.vmem [shape: f32[2,1024], index: 0, kind: input, shape index: {}, may-alias: {0,1}]
  %s1 = inlined_call_operand.vmem [shape: f32[2,1024], index: 1, kind: output, shape index: {}, may-alias: {0,1}]
  %s2 = sld [smem:[#allocation0]]
  $region14: #{_tiled_copy_forward.1} parent=0
    _
  %s4 = ssub.s32 1, %s2
  %s5 = scalar_select 0, %s4, %s2
  // Predicated region
  $region2: #{_tiled_copy_forward.1} parent=0 // pred_check
    _
  $region3: #{_tiled_copy_forward.1} parent=0 // pred_check_branch
    %7 = sbr.rel (0) target = $region5
  $region4: #{_tiled_copy_forward.1} parent=0 // pred_region
    _
  $region5: #{_tiled_copy_forward.1} parent=0 // pred_fallthru
    _
  %v8 = vld [vmem:[%s0] sm:$0xff]
  %v9 = vld [vmem:[%s0 + $0x8] sm:$0xff]
  %10 = vst [vmem:[%s1] sm:$0xff] %v8
  %11 = vst [vmem:[%s1 + $0x8] sm:$0xff] %v9
  // Predicated region
  $region6: #{_tiled_copy_forward.1} parent=0 // pred_check
    _
  $region7: #{_tiled_copy_forward.1} parent=0 // pred_check_branch
    %13 = sbr.rel (0) target = $region9
  $region8: #{_tiled_copy_forward.1} parent=0 // pred_region
    _
  $region9: #{_tiled_copy_forward.1} parent=0 // pred_fallthru
    _
  // Predicated region
  $region10: #{_tiled_copy_forward.1} parent=0 // pred_check
    _
  $region11: #{_tiled_copy_forward.1} parent=0 // pred_check_branch
    %15 = sbr.rel (0) target = $region13
  $region12: #{_tiled_copy_forward.1} parent=0 // pred_region
    _
  $region13: #{_tiled_copy_forward.1} parent=0 // pred_fallthru
    _

</llo_original>
